<compile_context>
chip_gen: v6e
topology: v6e:2x2x1
jax: 0.10.0
libtpu: 0.0.40
codegen_flags: <defaults>
</compile_context>

<pallas_src>
import functools

import jax
import jax.numpy as jnp
from jax.experimental import pallas as pl
from jax.experimental.pallas import tpu as pltpu

BN_EPS = 0.01


# ----------------------------------------------------------------------------- kernels
def _folded_bn(v, aff_ref):
    """linear-bias + training-mode BatchNorm1d folded into one scale/shift FMA (f32)."""
    aff = aff_ref[...].astype(jnp.float32)          # (3, F): [bias; gamma; beta]
    v = v + aff[0:1, :]
    mu = jnp.mean(v, axis=0, keepdims=True)
    d = v - mu
    var = jnp.mean(d * d, axis=0, keepdims=True)    # biased var == PyTorch training BN
    scale = aff[1:2, :] * jax.lax.rsqrt(var + BN_EPS)
    shift = aff[2:3, :] - mu * scale
    return v * scale + shift


def _fused_kernel(x_ref, w1_ref, aff5_ref, w6_ref, aff10_ref, out_ref, emb_ref):
    """Single-launch encoder+decoder; grid over output-feature tiles.

    x / w1 / aff5 are resident, so the tiny (B,D)x(D,32) encoder matmul + BN5 is
    recomputed per tile (costs ~nothing, keeps every grid step independent).
    """
    h = jnp.dot(x_ref[...], w1_ref[...], preferred_element_type=jnp.float32)
    h = _folded_bn(h, aff5_ref)
    emb_ref[...] = h.astype(emb_ref.dtype)

    # decoder tile: fc6 + BN10 + sigmoid (BN10 stats are over the batch only,
    # so per-feature tiling is exact)
    y = jnp.dot(h.astype(w6_ref.dtype), w6_ref[...], preferred_element_type=jnp.float32)
    y = _folded_bn(y, aff10_ref)
    out_ref[...] = jax.nn.sigmoid(y).astype(out_ref.dtype)


def _encoder_kernel(x_ref, w1_ref, aff5_ref, emb_ref):
    """Fallback encoder: fc1 accumulated over K tiles directly into the resident emb
    output block (f32), folded BN5 applied on the last grid step (no scratch)."""
    k = pl.program_id(0)

    @pl.when(k == 0)
    def _():
        emb_ref[...] = jnp.zeros_like(emb_ref)

    emb_ref[...] += jnp.dot(x_ref[...], w1_ref[...], preferred_element_type=jnp.float32)

    @pl.when(k == pl.num_programs(0) - 1)
    def _():
        emb_ref[...] = _folded_bn(emb_ref[...], aff5_ref)


def _decoder_kernel(h_ref, w6_ref, aff10_ref, out_ref):
    """Fallback decoder: per output-feature tile fc6 + BN10 + sigmoid."""
    y = jnp.dot(h_ref[...].astype(w6_ref.dtype), w6_ref[...],
                preferred_element_type=jnp.float32)
    y = _folded_bn(y, aff10_ref)
    out_ref[...] = jax.nn.sigmoid(y).astype(out_ref.dtype)


# ----------------------------------------------------------------------------- sizing
def _vmem_budget_bytes():
    """~75% of physical VMEM per core (96 MiB on v5e/v6e, 48 MiB on v7x)."""
    cap = 64 * 1024 * 1024                       # conservative default (v7x physical)
    try:
        cap = int(pltpu.get_tpu_info().vmem_capacity_bytes)
    except Exception:
        pass
    return (cap * 3) // 4


def _vmem_bytes_2d(rows, cols, dtype):
    """VMEM footprint of a (rows, cols) block incl. (sublane, 128-lane) padding."""
    it = jnp.dtype(dtype).itemsize
    sub = 8 * (4 // it)                          # 8 for f32, 16 for bf16
    r = -(-rows // sub) * sub
    c = -(-cols // 128) * 128
    return r * c * it


def _largest_tile(d, max_cols, *, prefer_two_steps=False):
    """Largest multiple-of-128 divisor of d that is <= max_cols (or d itself)."""
    if d <= 128 or d % 128 != 0:
        return d                                 # full-dim block is always legal
    cap = min(max_cols, d)
    if prefer_two_steps and d % 256 == 0 and d // 2 >= 4096:
        cap = min(cap, d // 2)                   # keep >=2 grid steps (v7x megacore)
    t = max(128, (cap // 128) * 128)
    while t >= 128:
        if d % t == 0:
            return t
        t -= 128
    return d


# ----------------------------------------------------------------------------- wrapper
def prepare_params(params, *, compute_dtype=jnp.bfloat16):
    """One-time parameter prep (hoisted out of the forward): bf16 matmul-operand weights
    and packed per-feature affine streams [bias; gamma; beta] -> one (3, F) array."""
    return dict(
        w1=params["w1"].astype(compute_dtype),                      # [D, H1]
        w6=params["w6"].astype(compute_dtype),                      # [H1, D]
        aff5=jnp.stack([params["b1"], params["g5"], params["be5"]]).astype(jnp.float32),
        aff10=jnp.stack([params["b6"], params["g10"], params["be10"]]).astype(jnp.float32),
    )


def ae_binarize_forward(x, prep, *, force_split=False):
    """AE_binarize forward. Returns (reconstruction [B, D] f32, embedding [B, H1] f32)."""
    B, D = x.shape
    H1 = prep["w1"].shape[1]
    cd = prep["w1"].dtype
    x_c = x.astype(cd)

    budget = _vmem_budget_bytes()

    # Decoder-side streamed bytes per output-feature column (double-buffered):
    # w6 tile + aff10 tile + out tile.
    per_col = 2 * (_vmem_bytes_2d(H1, 128, cd)
                   + _vmem_bytes_2d(3, 128, jnp.float32)
                   + _vmem_bytes_2d(B, 128, jnp.float32)) // 128

    # Residents of the fused kernel: x, w1, aff5, emb.
    resident = (_vmem_bytes_2d(B, D, cd) + _vmem_bytes_2d(D, H1, cd)
                + _vmem_bytes_2d(3, H1, jnp.float32) + _vmem_bytes_2d(B, H1, jnp.float32))

    fused_ok = (not force_split) and (resident + 128 * per_col <= budget)

    if fused_ok:
        # ------------------------------ fused single launch ------------------------------
        max_tn = max(128, (budget - resident) // per_col)
        tn = _largest_tile(D, max_tn, prefer_two_steps=True)
        recon, emb = pl.pallas_call(
            _fused_kernel,
            out_shape=(jax.ShapeDtypeStruct((B, D), jnp.float32),
                       jax.ShapeDtypeStruct((B, H1), jnp.float32)),
            grid=(D // tn,),
            in_specs=[
                pl.BlockSpec((B, D), lambda j: (0, 0)),     # x (resident)
                pl.BlockSpec((D, H1), lambda j: (0, 0)),    # w1 (resident)
                pl.BlockSpec((3, H1), lambda j: (0, 0)),    # fc1 bias / BN5 gamma,beta
                pl.BlockSpec((H1, tn), lambda j: (0, j)),   # w6 tile (streamed)
                pl.BlockSpec((3, tn), lambda j: (0, j)),    # fc6 bias / BN10 gamma,beta
            ],
            out_specs=(pl.BlockSpec((B, tn), lambda j: (0, j)),
                       pl.BlockSpec((B, H1), lambda j: (0, 0))),
            compiler_params=pltpu.CompilerParams(
                dimension_semantics=("arbitrary",),
                vmem_limit_bytes=int(budget)),
        )(x_c, prep["w1"], prep["aff5"], prep["w6"], prep["aff10"])
        return recon, emb

    # ------------------------------ two-kernel fallback (very large D) ------------------
    # encoder: reduction over K tiles, accumulate straight into the resident emb block
    per_k = 2 * (_vmem_bytes_2d(B, 128, cd) + _vmem_bytes_2d(128, H1, cd)) // 128
    max_tk = max(128, (budget - 256 * 1024) // per_k)
    tk = _largest_tile(D, max_tk)
    emb = pl.pallas_call(
        _encoder_kernel,
        out_shape=jax.ShapeDtypeStruct((B, H1), jnp.float32),
        grid=(D // tk,),
        in_specs=[
            pl.BlockSpec((B, tk), lambda k: (0, k)),
            pl.BlockSpec((tk, H1), lambda k: (k, 0)),
            pl.BlockSpec((3, H1), lambda k: (0, 0)),
        ],
        out_specs=pl.BlockSpec((B, H1), lambda k: (0, 0)),
        compiler_params=pltpu.CompilerParams(
            dimension_semantics=("arbitrary",),
            vmem_limit_bytes=int(budget)),
    )(x_c, prep["w1"], prep["aff5"])

    # decoder: feature-parallel ("parallel" -> splits across both v7x TensorCores)
    max_tn = max(128, (budget - 256 * 1024) // per_col)
    tn = _largest_tile(D, max_tn, prefer_two_steps=True)
    recon = pl.pallas_call(
        _decoder_kernel,
        out_shape=jax.ShapeDtypeStruct((B, D), jnp.float32),
        grid=(D // tn,),
        in_specs=[
            pl.BlockSpec((B, H1), lambda j: (0, 0)),        # emb (resident)
            pl.BlockSpec((H1, tn), lambda j: (0, j)),
            pl.BlockSpec((3, tn), lambda j: (0, j)),
        ],
        out_specs=pl.BlockSpec((B, tn), lambda j: (0, j)),
        compiler_params=pltpu.CompilerParams(
            dimension_semantics=("parallel",),
            vmem_limit_bytes=int(budget)),
    )(emb, prep["w6"], prep["aff10"])
    return recon, emb


# ----------------------------------------------------------------------------- reference
def make_params(key, input_size, h1=32):
    """Deterministic synthetic parameters matching nn.Linear / nn.BatchNorm1d shapes."""
    ks = jax.random.split(key, 8)

    def linear(kw, kb, fan_in, fan_out):
        bound = 1.0 / jnp.sqrt(jnp.float32(fan_in))
        w = jax.random.uniform(kw, (fan_in, fan_out), jnp.float32, -bound, bound)  # [in, out]
        b = jax.random.uniform(kb, (fan_out,), jnp.float32, -bound, bound)
        return w, b

    w1, b1 = linear(ks[0], ks[1], input_size, h1)          # fc1
    w6, b6 = linear(ks[2], ks[3], h1, input_size)          # fc6
    g5 = 1.0 + 0.1 * jax.random.normal(ks[4], (h1,), jnp.float32)
    be5 = 0.1 * jax.random.normal(ks[5], (h1,), jnp.float32)
    g10 = 1.0 + 0.1 * jax.random.normal(ks[6], (input_size,), jnp.float32)
    be10 = 0.1 * jax.random.normal(ks[7], (input_size,), jnp.float32)
    return dict(w1=w1, b1=b1, g5=g5, be5=be5, w6=w6, b6=b6, g10=g10, be10=be10)


def reference_forward(x, p, compute_dtype=jnp.bfloat16):
    """Pure-JAX reference mirroring the PyTorch forward (training-mode BN), using the same
    bf16 matmul-operand precision as the kernels (f32 accumulation, f32 BN / sigmoid)."""
    def bn(v, g, b):
        mu = jnp.mean(v, axis=0, keepdims=True)
        var = jnp.mean((v - mu) ** 2, axis=0, keepdims=True)
        return (v - mu) * jax.lax.rsqrt(var + BN_EPS) * g + b

    h = jnp.dot(x.astype(compute_dtype), p["w1"].astype(compute_dtype),
                preferred_element_type=jnp.float32) + p["b1"]
    h = bn(h, p["g5"], p["be5"])
    y = jnp.dot(h.astype(compute_dtype), p["w6"].astype(compute_dtype),
                preferred_element_type=jnp.float32) + p["b6"]
    y = bn(y, p["g10"], p["be10"])
    return jax.nn.sigmoid(y), h


if __name__ == "__main__":
    key = jax.random.PRNGKey(0)
    k_x, k_p = jax.random.split(key)

    B, INPUT_SIZE, H1 = 8, 512, 32
    x = jax.random.normal(k_x, (B, INPUT_SIZE), jnp.float32)
    params = make_params(k_p, INPUT_SIZE, H1)
    prep = prepare_params(params)                    # one-time param prep (hoisted)

    fwd = jax.jit(functools.partial(ae_binarize_forward, force_split=False))
    recon, emb = jax.block_until_ready(fwd(x, prep))

    # also exercise the large-D fallback (two-kernel) path on the same small shapes
    fwd_split = jax.jit(functools.partial(ae_binarize_forward, force_split=True))
    recon_s, emb_s = jax.block_until_ready(fwd_split(x, prep))

    recon_ref, emb_ref = reference_forward(x, params)

    assert recon.shape == (B, INPUT_SIZE) and emb.shape == (B, H1)
    for r, e in ((recon, emb), (recon_s, emb_s)):
        assert jnp.allclose(r, recon_ref, atol=2e-3, rtol=2e-3), \
            float(jnp.max(jnp.abs(r - recon_ref)))
        assert jnp.allclose(e, emb_ref, atol=2e-3, rtol=2e-3), \
            float(jnp.max(jnp.abs(e - emb_ref)))

    print("KERNEL_OK")
</pallas_src>

<mosaic_0001>
module attributes {stable_mosaic.version = 11 : i64} {
  func.func @_fused_kernel(%arg0: i32, %arg1: memref<8x512xbf16, #tpu.memory_space<vmem>>, %arg2: memref<512x32xbf16, #tpu.memory_space<vmem>>, %arg3: memref<3x32xf32, #tpu.memory_space<vmem>>, %arg4: memref<32x512xbf16, #tpu.memory_space<vmem>>, %arg5: memref<3x512xf32, #tpu.memory_space<vmem>>, %arg6: memref<8x512xf32, #tpu.memory_space<vmem>>, %arg7: memref<8x32xf32, #tpu.memory_space<vmem>>) attributes {dimension_semantics = [#tpu.dimension_semantics<arbitrary>], iteration_bounds = array<i64: 1>, scalar_prefetch = 0 : i64, scratch_operands = 0 : i64, tpu.core_type = #tpu.core_type<tc>, window_params = [{pipeline_mode = #tpu.pipeline_mode<synchronous>, transform_indices = @transform_0, window_bounds = array<i64: 8, 512>}, {pipeline_mode = #tpu.pipeline_mode<synchronous>, transform_indices = @transform_1, window_bounds = array<i64: 512, 32>}, {pipeline_mode = #tpu.pipeline_mode<synchronous>, transform_indices = @transform_2, window_bounds = array<i64: 3, 32>}, {transform_indices = @transform_3, window_bounds = array<i64: 32, 512>}, {transform_indices = @transform_4, window_bounds = array<i64: 3, 512>}, {transform_indices = @transform_5, window_bounds = array<i64: 8, 512>}, {pipeline_mode = #tpu.pipeline_mode<synchronous>, transform_indices = @transform_6, window_bounds = array<i64: 8, 32>}]} {
    %c0 = arith.constant 0 : index
    %c0_0 = arith.constant 0 : index
    %0 = vector.load %arg1[%c0, %c0_0] : memref<8x512xbf16, #tpu.memory_space<vmem>>, vector<8x512xbf16>
    %c0_1 = arith.constant 0 : index
    %c0_2 = arith.constant 0 : index
    %1 = vector.load %arg2[%c0_1, %c0_2] : memref<512x32xbf16, #tpu.memory_space<vmem>>, vector<512x32xbf16>
    %cst = arith.constant dense<0.000000e+00> : vector<8x32xf32>
    %2 = tpu.matmul %0, %1, %cst {dimension_numbers = #tpu.dot_dimension_numbers<[1], [0], [0], [1], [0, 0, 1, 1], [], []>} : vector<8x512xbf16>, vector<512x32xbf16>, vector<8x32xf32> -> vector<8x32xf32>
    %c0_3 = arith.constant 0 : index
    %c0_4 = arith.constant 0 : index
    %3 = vector.load %arg3[%c0_3, %c0_4] : memref<3x32xf32, #tpu.memory_space<vmem>>, vector<3x32xf32>
    %4 = vector.extract_strided_slice %3 {offsets = [0, 0], sizes = [1, 32], strides = [1, 1]} : vector<3x32xf32> to vector<1x32xf32>
    %5 = vector.broadcast %4 : vector<1x32xf32> to vector<8x32xf32>
    %6 = arith.addf %2, %5 : vector<8x32xf32>
    %cst_5 = arith.constant dense<0.000000e+00> : vector<32xf32>
    %7 = vector.multi_reduction <add>, %6, %cst_5 [0] : vector<8x32xf32> to vector<32xf32>
    %8 = vector.shape_cast %7 : vector<32xf32> to vector<1x32xf32>
    %cst_6 = arith.constant 8.000000e+00 : f32
    %9 = vector.broadcast %cst_6 : f32 to vector<1x32xf32>
    %10 = arith.divf %8, %9 : vector<1x32xf32>
    %11 = vector.broadcast %10 : vector<1x32xf32> to vector<8x32xf32>
    %12 = arith.subf %6, %11 : vector<8x32xf32>
    %13 = arith.mulf %12, %12 : vector<8x32xf32>
    %cst_7 = arith.constant dense<0.000000e+00> : vector<32xf32>
    %14 = vector.multi_reduction <add>, %13, %cst_7 [0] : vector<8x32xf32> to vector<32xf32>
    %15 = vector.shape_cast %14 : vector<32xf32> to vector<1x32xf32>
    %cst_8 = arith.constant 8.000000e+00 : f32
    %16 = vector.broadcast %cst_8 : f32 to vector<1x32xf32>
    %17 = arith.divf %15, %16 : vector<1x32xf32>
    %18 = vector.extract_strided_slice %3 {offsets = [1, 0], sizes = [1, 32], strides = [1, 1]} : vector<3x32xf32> to vector<1x32xf32>
    %cst_9 = arith.constant 0.00999999977 : f32
    %19 = vector.broadcast %cst_9 : f32 to vector<1x32xf32>
    %20 = arith.addf %17, %19 : vector<1x32xf32>
    %21 = math.rsqrt %20 : vector<1x32xf32>
    %22 = arith.mulf %18, %21 : vector<1x32xf32>
    %23 = vector.extract_strided_slice %3 {offsets = [2, 0], sizes = [1, 32], strides = [1, 1]} : vector<3x32xf32> to vector<1x32xf32>
    %24 = arith.mulf %10, %22 : vector<1x32xf32>
    %25 = arith.subf %23, %24 : vector<1x32xf32>
    %26 = vector.broadcast %22 : vector<1x32xf32> to vector<8x32xf32>
    %27 = arith.mulf %6, %26 : vector<8x32xf32>
    %28 = vector.broadcast %25 : vector<1x32xf32> to vector<8x32xf32>
    %29 = arith.addf %27, %28 : vector<8x32xf32>
    %c0_10 = arith.constant 0 : index
    %c0_11 = arith.constant 0 : index
    %30 = vector.load %arg7[%c0_10, %c0_11] : memref<8x32xf32, #tpu.memory_space<vmem>>, vector<8x32xf32>
    tpu.vector_store %arg7[%c0_10, %c0_11], %29 {strides = array<i32>} : memref<8x32xf32, #tpu.memory_space<vmem>>, vector<8x32xf32>,
    %31 = arith.truncf %29 : vector<8x32xf32> to vector<8x32xbf16>
    %c0_12 = arith.constant 0 : index
    %c0_13 = arith.constant 0 : index
    %32 = vector.load %arg4[%c0_12, %c0_13] : memref<32x512xbf16, #tpu.memory_space<vmem>>, vector<32x512xbf16>
    %cst_14 = arith.constant dense<0.000000e+00> : vector<8x512xf32>
    %33 = tpu.matmul %31, %32, %cst_14 {dimension_numbers = #tpu.dot_dimension_numbers<[1], [0], [0], [1], [0, 0, 1, 1], [], []>} : vector<8x32xbf16>, vector<32x512xbf16>, vector<8x512xf32> -> vector<8x512xf32>
    %c0_15 = arith.constant 0 : index
    %c0_16 = arith.constant 0 : index
    %34 = vector.load %arg5[%c0_15, %c0_16] : memref<3x512xf32, #tpu.memory_space<vmem>>, vector<3x512xf32>
    %35 = vector.extract_strided_slice %34 {offsets = [0, 0], sizes = [1, 512], strides = [1, 1]} : vector<3x512xf32> to vector<1x512xf32>
    %36 = vector.broadcast %35 : vector<1x512xf32> to vector<8x512xf32>
    %37 = arith.addf %33, %36 : vector<8x512xf32>
    %cst_17 = arith.constant dense<0.000000e+00> : vector<512xf32>
    %38 = vector.multi_reduction <add>, %37, %cst_17 [0] : vector<8x512xf32> to vector<512xf32>
    %39 = vector.shape_cast %38 : vector<512xf32> to vector<1x512xf32>
    %cst_18 = arith.constant 8.000000e+00 : f32
    %40 = vector.broadcast %cst_18 : f32 to vector<1x512xf32>
    %41 = arith.divf %39, %40 : vector<1x512xf32>
    %42 = vector.broadcast %41 : vector<1x512xf32> to vector<8x512xf32>
    %43 = arith.subf %37, %42 : vector<8x512xf32>
    %44 = arith.mulf %43, %43 : vector<8x512xf32>
    %cst_19 = arith.constant dense<0.000000e+00> : vector<512xf32>
    %45 = vector.multi_reduction <add>, %44, %cst_19 [0] : vector<8x512xf32> to vector<512xf32>
    %46 = vector.shape_cast %45 : vector<512xf32> to vector<1x512xf32>
    %cst_20 = arith.constant 8.000000e+00 : f32
    %47 = vector.broadcast %cst_20 : f32 to vector<1x512xf32>
    %48 = arith.divf %46, %47 : vector<1x512xf32>
    %49 = vector.extract_strided_slice %34 {offsets = [1, 0], sizes = [1, 512], strides = [1, 1]} : vector<3x512xf32> to vector<1x512xf32>
    %cst_21 = arith.constant 0.00999999977 : f32
    %50 = vector.broadcast %cst_21 : f32 to vector<1x512xf32>
    %51 = arith.addf %48, %50 : vector<1x512xf32>
    %52 = math.rsqrt %51 : vector<1x512xf32>
    %53 = arith.mulf %49, %52 : vector<1x512xf32>
    %54 = vector.extract_strided_slice %34 {offsets = [2, 0], sizes = [1, 512], strides = [1, 1]} : vector<3x512xf32> to vector<1x512xf32>
    %55 = arith.mulf %41, %53 : vector<1x512xf32>
    %56 = arith.subf %54, %55 : vector<1x512xf32>
    %57 = vector.broadcast %53 : vector<1x512xf32> to vector<8x512xf32>
    %58 = arith.mulf %37, %57 : vector<8x512xf32>
    %59 = vector.broadcast %56 : vector<1x512xf32> to vector<8x512xf32>
    %60 = arith.addf %58, %59 : vector<8x512xf32>
    %61 = arith.negf %60 : vector<8x512xf32>
    %62 = math.exp %61 : vector<8x512xf32>
    %cst_22 = arith.constant 1.000000e+00 : f32
    %63 = vector.broadcast %cst_22 : f32 to vector<8x512xf32>
    %64 = arith.addf %63, %62 : vector<8x512xf32>
    %65 = arith.divf %63, %64 : vector<8x512xf32>
    %c0_23 = arith.constant 0 : index
    %c0_24 = arith.constant 0 : index
    %66 = vector.load %arg6[%c0_23, %c0_24] : memref<8x512xf32, #tpu.memory_space<vmem>>, vector<8x512xf32>
    tpu.vector_store %arg6[%c0_23, %c0_24], %65 {strides = array<i32>} : memref<8x512xf32, #tpu.memory_space<vmem>>, vector<8x512xf32>,
    return
  }
  func.func @transform_0(%arg0: i32) -> (i32, i32) {
    %c0_i32 = arith.constant 0 : i32
    %c0_i32_0 = arith.constant 0 : i32
    %c0_i32_1 = arith.constant 0 : i32
    return %c0_i32, %c0_i32_0 : i32, i32
  }
  func.func @transform_1(%arg0: i32) -> (i32, i32) {
    %c0_i32 = arith.constant 0 : i32
    %c0_i32_0 = arith.constant 0 : i32
    %c0_i32_1 = arith.constant 0 : i32
    return %c0_i32, %c0_i32_0 : i32, i32
  }
  func.func @transform_2(%arg0: i32) -> (i32, i32) {
    %c0_i32 = arith.constant 0 : i32
    %c0_i32_0 = arith.constant 0 : i32
    %c0_i32_1 = arith.constant 0 : i32
    return %c0_i32, %c0_i32_0 : i32, i32
  }
  func.func @transform_3(%arg0: i32) -> (i32, i32) {
    %c0_i32 = arith.constant 0 : i32
    %c0_i32_0 = arith.constant 0 : i32
    return %c0_i32, %arg0 : i32, i32
  }
  func.func @transform_4(%arg0: i32) -> (i32, i32) {
    %c0_i32 = arith.constant 0 : i32
    %c0_i32_0 = arith.constant 0 : i32
    return %c0_i32, %arg0 : i32, i32
  }
  func.func @transform_5(%arg0: i32) -> (i32, i32) {
    %c0_i32 = arith.constant 0 : i32
    %c0_i32_0 = arith.constant 0 : i32
    return %c0_i32, %arg0 : i32, i32
  }
  func.func @transform_6(%arg0: i32) -> (i32, i32) {
    %c0_i32 = arith.constant 0 : i32
    %c0_i32_0 = arith.constant 0 : i32
    %c0_i32_1 = arith.constant 0 : i32
    return %c0_i32, %c0_i32_0 : i32, i32
  }
}

</mosaic_0001>

<llo_original>
// kernel: ae_binarize_forward.1
$region0: #{ae_binarize_forward.1}
  #allocation0 [shape = 'u32[]', space=smem, size = 0x4, offset = 0x4, fixed_abs, tag = 'smem constant byte address 0x4 - core index']
  #allocation1 [shape = 'u32[144,128]{1,0:T(1,128)}', space=vmem, size = 0x12000, scoped, tag = 'internal scratch']
  %s0 = inlined_call_operand.vmem [shape: bf16[8,512], index: 0, kind: input, shape index: {}]
  %s1 = inlined_call_operand.vmem [shape: bf16[512,32], index: 1, kind: input, shape index: {}]
  %s2 = inlined_call_operand.vmem [shape: f32[3,32], index: 2, kind: input, shape index: {}]
  %s3 = inlined_call_operand.vmem [shape: bf16[32,512], index: 3, kind: input, shape index: {}]
  %s4 = inlined_call_operand.vmem [shape: f32[3,512], index: 4, kind: input, shape index: {}]
  %s5 = inlined_call_operand.hbm [shape: f32[8,512], index: 5, kind: output, shape index: {0}]
  %s6 = inlined_call_operand.hbm [shape: f32[8,32], index: 6, kind: output, shape index: {1}]
  %7 = xla_tuple %s5, %s6
  %s8 = sld [smem:[#allocation0]]
  $region38: #{ae_binarize_forward.1} parent=0
    _
  %s10 = ssub.s32 1, %s8
  %s11 = scalar_select 0, %s10, %s8
  $region1: #{ae_binarize_forward.1} parent=0
    #allocation2 [shape = 'u8[16384]{0}', space=vmem, size = 0x4000, scoped, tag = 'output window, operand 0, single buffered']
    #allocation3 [shape = 's32[1]{0}', space=sflag, size = 0x4, scoped, tag = 'scoped memory for ae_binarize_forward.1']
    #allocation4 [shape = 'u8[4096]{0}', space=vmem, size = 0x1000, scoped, tag = 'output window, operand 1, single buffered']
    #allocation5 [shape = 's32[1]{0}', space=sflag, size = 0x4, scoped, tag = 'scoped memory for ae_binarize_forward.1']
    %12 = vsyncpa [#allocation3], 0
    %13 = vsyncpa [#allocation5], 0
    // Predicated region
    $region2: #{ae_binarize_forward.1} parent=1 // pred_check
      _
    $region3: #{ae_binarize_forward.1} parent=1 // pred_check_branch
      %15 = sbr.rel (0) target = $region5
    $region4: #{ae_binarize_forward.1} parent=1 // pred_region
      _
    $region5: #{ae_binarize_forward.1} parent=1 // pred_fallthru
      _
    // Predicated region
    $region6: #{ae_binarize_forward.1} parent=1 // pred_check
      _
    $region7: #{ae_binarize_forward.1} parent=1 // pred_check_branch
      %17 = sbr.rel (0) target = $region9
    $region8: #{ae_binarize_forward.1} parent=1 // pred_region
      _
    $region9: #{ae_binarize_forward.1} parent=1 // pred_fallthru
      _
    // Predicated region
    $region10: #{ae_binarize_forward.1} parent=1 // pred_check
      _
    $region11: #{ae_binarize_forward.1} parent=1 // pred_check_branch
      %19 = sbr.rel (0) target = $region13
    $region12: #{ae_binarize_forward.1} parent=1 // pred_region
      _
    $region13: #{ae_binarize_forward.1} parent=1 // pred_fallthru
      _
    // Predicated region
    $region14: #{ae_binarize_forward.1} parent=1 // pred_check
      _
    $region15: #{ae_binarize_forward.1} parent=1 // pred_check_branch
      %21 = sbr.rel (0) target = $region17
    $region16: #{ae_binarize_forward.1} parent=1 // pred_region
      _
    $region17: #{ae_binarize_forward.1} parent=1 // pred_fallthru
      _
    // Predicated region
    $region18: #{ae_binarize_forward.1} parent=1 // pred_check
      _
    $region19: #{ae_binarize_forward.1} parent=1 // pred_check_branch
      %23 = sbr.rel (0) target = $region21
    $region20: #{ae_binarize_forward.1} parent=1 // pred_region
      _
    $region21: #{ae_binarize_forward.1} parent=1 // pred_fallthru
      _
    %v25 = vld [vmem:[%s0] sm:$0xff]
    %v26 = vld [vmem:[%s0 + $0x8] sm:$0xff]
    %v27 = vld [vmem:[%s1] sm:$0xf]
    %v28 = vld [vmem:[%s1 + $0x4] sm:$0xf]
    %v29 = vld [vmem:[%s1 + $0x8] sm:$0xf]
    %v30 = vld [vmem:[%s1 + $0xc] sm:$0xf]
    %v31 = vld [vmem:[%s1 + $0x10] sm:$0xf]
    %v32 = vld [vmem:[%s1 + $0x14] sm:$0xf]
    %v33 = vld [vmem:[%s1 + $0x18] sm:$0xf]
    %v34 = vld [vmem:[%s1 + $0x1c] sm:$0xf]
    %v35 = vld [vmem:[%s1 + $0x20] sm:$0xf]
    %v36 = vld [vmem:[%s1 + $0x24] sm:$0xf]
    %v37 = vld [vmem:[%s1 + $0x28] sm:$0xf]
    %v38 = vld [vmem:[%s1 + $0x2c] sm:$0xf]
    %v39 = vld [vmem:[%s1 + $0x30] sm:$0xf]
    %v40 = vld [vmem:[%s1 + $0x34] sm:$0xf]
    %v41 = vld [vmem:[%s1 + $0x38] sm:$0xf]
    %v42 = vld [vmem:[%s1 + $0x3c] sm:$0xf]
    %v43 = vld [vmem:[%s1 + $0x40] sm:$0xf]
    %v44 = vld [vmem:[%s1 + $0x44] sm:$0xf]
    %v45 = vld [vmem:[%s1 + $0x48] sm:$0xf]
    %v46 = vld [vmem:[%s1 + $0x4c] sm:$0xf]
    %v47 = vld [vmem:[%s1 + $0x50] sm:$0xf]
    %v48 = vld [vmem:[%s1 + $0x54] sm:$0xf]
    %v49 = vld [vmem:[%s1 + $0x58] sm:$0xf]
    %v50 = vld [vmem:[%s1 + $0x5c] sm:$0xf]
    %v51 = vld [vmem:[%s1 + $0x60] sm:$0xf]
    %v52 = vld [vmem:[%s1 + $0x64] sm:$0xf]
    %v53 = vld [vmem:[%s1 + $0x68] sm:$0xf]
    %v54 = vld [vmem:[%s1 + $0x6c] sm:$0xf]
    %v55 = vld [vmem:[%s1 + $0x70] sm:$0xf]
    %v56 = vld [vmem:[%s1 + $0x74] sm:$0xf]
    %v57 = vld [vmem:[%s1 + $0x78] sm:$0xf]
    %v58 = vld [vmem:[%s1 + $0x7c] sm:$0xf]
    %v59 = vld [vmem:[%s1 + $0x80] sm:$0xf]
    %v60 = vld [vmem:[%s1 + $0x84] sm:$0xf]
    %v61 = vld [vmem:[%s1 + $0x88] sm:$0xf]
    %v62 = vld [vmem:[%s1 + $0x8c] sm:$0xf]
    %v63 = vld [vmem:[%s1 + $0x90] sm:$0xf]
    %v64 = vld [vmem:[%s1 + $0x94] sm:$0xf]
    %v65 = vld [vmem:[%s1 + $0x98] sm:$0xf]
    %v66 = vld [vmem:[%s1 + $0x9c] sm:$0xf]
    %v67 = vld [vmem:[%s1 + $0xa0] sm:$0xf]
    %v68 = vld [vmem:[%s1 + $0xa4] sm:$0xf]
    %v69 = vld [vmem:[%s1 + $0xa8] sm:$0xf]
    %v70 = vld [vmem:[%s1 + $0xac] sm:$0xf]
    %v71 = vld [vmem:[%s1 + $0xb0] sm:$0xf]
    %v72 = vld [vmem:[%s1 + $0xb4] sm:$0xf]
    %v73 = vld [vmem:[%s1 + $0xb8] sm:$0xf]
    %v74 = vld [vmem:[%s1 + $0xbc] sm:$0xf]
    %v75 = vld [vmem:[%s1 + $0xc0] sm:$0xf]
    %v76 = vld [vmem:[%s1 + $0xc4] sm:$0xf]
    %v77 = vld [vmem:[%s1 + $0xc8] sm:$0xf]
    %v78 = vld [vmem:[%s1 + $0xcc] sm:$0xf]
    %v79 = vld [vmem:[%s1 + $0xd0] sm:$0xf]
    %v80 = vld [vmem:[%s1 + $0xd4] sm:$0xf]
    %v81 = vld [vmem:[%s1 + $0xd8] sm:$0xf]
    %v82 = vld [vmem:[%s1 + $0xdc] sm:$0xf]
    %v83 = vld [vmem:[%s1 + $0xe0] sm:$0xf]
    %v84 = vld [vmem:[%s1 + $0xe4] sm:$0xf]
    %v85 = vld [vmem:[%s1 + $0xe8] sm:$0xf]
    %v86 = vld [vmem:[%s1 + $0xec] sm:$0xf]
    %v87 = vld [vmem:[%s1 + $0xf0] sm:$0xf]
    %v88 = vld [vmem:[%s1 + $0xf4] sm:$0xf]
    %v89 = vld [vmem:[%s1 + $0xf8] sm:$0xf]
    %v90 = vld [vmem:[%s1 + $0xfc] sm:$0xf]
    %v91 = vld [vmem:[%s2] sm:$0x7]
    %v92 = vlaneseq
    %v93 = vshrl.u32 %v92, 7
    %v94 = vsub.s32 0, %v93
    %v95 = vrot.slane %v91, %v94
    %v98 = vunpack.c.l.b16 %v25
    %v99 = vunpack.c.h.b16 %v25
    %v100 = vunpack.c.l.b16 %v26
    %v101 = vunpack.c.h.b16 %v26
    %v102 = vpack.c.b16 %v98, %v98
    %v103 = vpack.c.b16 %v99, %v99
    %v104 = vpack.c.b16 %v100, %v100
    %v105 = vpack.c.b16 %v101, %v101
    %v174 = vunpack.c.l.b16 %v27
    %v175 = vunpack.c.l.b16 %v28
    %v176 = vunpack.c.l.b16 %v29
    %v177 = vunpack.c.l.b16 %v30
    %v178 = vunpack.c.l.b16 %v31
    %v179 = vunpack.c.l.b16 %v32
    %v180 = vunpack.c.l.b16 %v33
    %v181 = vunpack.c.l.b16 %v34
    %v182 = vunpack.c.l.b16 %v35
    %v183 = vunpack.c.l.b16 %v36
    %v184 = vunpack.c.l.b16 %v37
    %v185 = vunpack.c.l.b16 %v38
    %v186 = vunpack.c.l.b16 %v39
    %v187 = vunpack.c.l.b16 %v40
    %v188 = vunpack.c.l.b16 %v41
    %v189 = vunpack.c.l.b16 %v42
    %v190 = vunpack.c.l.b16 %v43
    %v191 = vunpack.c.l.b16 %v44
    %v192 = vunpack.c.l.b16 %v45
    %v193 = vunpack.c.l.b16 %v46
    %v194 = vunpack.c.l.b16 %v47
    %v195 = vunpack.c.l.b16 %v48
    %v196 = vunpack.c.l.b16 %v49
    %v197 = vunpack.c.l.b16 %v50
    %v198 = vunpack.c.l.b16 %v51
    %v199 = vunpack.c.l.b16 %v52
    %v200 = vunpack.c.l.b16 %v53
    %v201 = vunpack.c.l.b16 %v54
    %v202 = vunpack.c.l.b16 %v55
    %v203 = vunpack.c.l.b16 %v56
    %v204 = vunpack.c.l.b16 %v57
    %v205 = vunpack.c.l.b16 %v58
    %v206 = vunpack.c.l.b16 %v59
    %v207 = vunpack.c.l.b16 %v60
    %v208 = vunpack.c.l.b16 %v61
    %v209 = vunpack.c.l.b16 %v62
    %v210 = vunpack.c.l.b16 %v63
    %v211 = vunpack.c.l.b16 %v64
    %v212 = vunpack.c.l.b16 %v65
    %v213 = vunpack.c.l.b16 %v66
    %v214 = vunpack.c.l.b16 %v67
    %v215 = vunpack.c.l.b16 %v68
    %v216 = vunpack.c.l.b16 %v69
    %v217 = vunpack.c.l.b16 %v70
    %v218 = vunpack.c.l.b16 %v71
    %v219 = vunpack.c.l.b16 %v72
    %v220 = vunpack.c.l.b16 %v73
    %v221 = vunpack.c.l.b16 %v74
    %v222 = vunpack.c.l.b16 %v75
    %v223 = vunpack.c.l.b16 %v76
    %v224 = vunpack.c.l.b16 %v77
    %v225 = vunpack.c.l.b16 %v78
    %v226 = vunpack.c.l.b16 %v79
    %v227 = vunpack.c.l.b16 %v80
    %v228 = vunpack.c.l.b16 %v81
    %v229 = vunpack.c.l.b16 %v82
    %v230 = vunpack.c.l.b16 %v83
    %v231 = vunpack.c.l.b16 %v84
    %v232 = vunpack.c.l.b16 %v85
    %v233 = vunpack.c.l.b16 %v86
    %v234 = vunpack.c.l.b16 %v87
    %v235 = vunpack.c.l.b16 %v88
    %v236 = vunpack.c.l.b16 %v89
    %v237 = vunpack.c.l.b16 %v90
    %v238 = vpack.c.b16 %v175, %v174
    %v239 = vpack.c.b16 %v177, %v176
    %v240 = vpack.c.b16 %v179, %v178
    %v241 = vpack.c.b16 %v181, %v180
    %v242 = vpack.c.b16 %v183, %v182
    %v243 = vpack.c.b16 %v185, %v184
    %v244 = vpack.c.b16 %v187, %v186
    %v245 = vpack.c.b16 %v189, %v188
    %v246 = vpack.c.b16 %v191, %v190
    %v247 = vpack.c.b16 %v193, %v192
    %v248 = vpack.c.b16 %v195, %v194
    %v249 = vpack.c.b16 %v197, %v196
    %v250 = vpack.c.b16 %v199, %v198
    %v251 = vpack.c.b16 %v201, %v200
    %v252 = vpack.c.b16 %v203, %v202
    %v253 = vpack.c.b16 %v205, %v204
    %v254 = vpack.c.b16 %v207, %v206
    %v255 = vpack.c.b16 %v209, %v208
    %v256 = vpack.c.b16 %v211, %v210
    %v257 = vpack.c.b16 %v213, %v212
    %v258 = vpack.c.b16 %v215, %v214
    %v259 = vpack.c.b16 %v217, %v216
    %v260 = vpack.c.b16 %v219, %v218
    %v261 = vpack.c.b16 %v221, %v220
    %v262 = vpack.c.b16 %v223, %v222
    %v263 = vpack.c.b16 %v225, %v224
    %v264 = vpack.c.b16 %v227, %v226
    %v265 = vpack.c.b16 %v229, %v228
    %v266 = vpack.c.b16 %v231, %v230
    %v267 = vpack.c.b16 %v233, %v232
    %v268 = vpack.c.b16 %v235, %v234
    %v269 = vpack.c.b16 %v237, %v236
    %302 = vmatprep.subr.bf16.mxu0 0
    %303 = vmatpush1.bf16.msra.mxu0 %v245
    %304 = vmatprep.subr.bf16.mxu0 0
    %305 = vmatpush1.bf16.msra.mxu0 %v244
    %306 = vmatprep.subr.bf16.mxu0 0
    %307 = vmatpush1.bf16.msra.mxu0 %v243
    %308 = vmatprep.subr.bf16.mxu0 0
    %309 = vmatpush1.bf16.msra.mxu0 %v242
    %310 = vmatprep.subr.bf16.mxu0 0
    %311 = vmatpush1.bf16.msra.mxu0 %v241
    %312 = vmatprep.subr.bf16.mxu0 0
    %313 = vmatpush1.bf16.msra.mxu0 %v240
    %314 = vmatprep.subr.bf16.mxu0 0
    %315 = vmatpush1.bf16.msra.mxu0 %v239
    %316 = vmatprep.subr.bf16.mxu0 0
    %317 = vmatpush1.bf16.msra.mxu0 %v238
    %318 = vmatprep.subr.bf16.mxu0 0
    %319 = vmatpush2.bf16.msra.mxu0 %v253
    %320 = vmatprep.subr.bf16.mxu0 0
    %321 = vmatpush2.bf16.msra.mxu0 %v252
    %322 = vmatprep.subr.bf16.mxu0 0
    %323 = vmatpush2.bf16.msra.mxu0 %v251
    %324 = vmatprep.subr.bf16.mxu0 0
    %325 = vmatpush2.bf16.msra.mxu0 %v250
    %326 = vmatprep.subr.bf16.mxu0 0
    %327 = vmatpush2.bf16.msra.mxu0 %v249
    %328 = vmatprep.subr.bf16.mxu0 0
    %329 = vmatpush2.bf16.msra.mxu0 %v248
    %330 = vmatprep.subr.bf16.mxu0 0
    %331 = vmatpush2.bf16.msra.mxu0 %v247
    %332 = vmatprep.subr.bf16.mxu0 0
    %333 = vmatpush2.bf16.msra.mxu0 %v246
    %334 = vmatprep.mubr.bf16.mxu0 %v103
    %335 = vmatmul.mubr.bf16.gmra.mxu0 %v102
    %v336 = vpop.f32.mrf.mxu0
    %v337 = vadd.f32 %v95, %v336
    %v338 = vpop.f32.mrf.mxu0
    %v339 = vpop.f32.mrf.mxu0
    %v340 = vpop.f32.mrf.mxu0
    %341 = vdwg.mxu0
    %342 = vmatprep.subr.bf16.mxu0 0
    %343 = vmatpush1.bf16.msra.mxu0 %v261
    %344 = vmatprep.subr.bf16.mxu0 0
    %345 = vmatpush1.bf16.msra.mxu0 %v260
    %346 = vmatprep.subr.bf16.mxu0 0
    %347 = vmatpush1.bf16.msra.mxu0 %v259
    %348 = vmatprep.subr.bf16.mxu0 0
    %349 = vmatpush1.bf16.msra.mxu0 %v258
    %350 = vmatprep.subr.bf16.mxu0 0
    %351 = vmatpush1.bf16.msra.mxu0 %v257
    %352 = vmatprep.subr.bf16.mxu0 0
    %353 = vmatpush1.bf16.msra.mxu0 %v256
    %354 = vmatprep.subr.bf16.mxu0 0
    %355 = vmatpush1.bf16.msra.mxu0 %v255
    %356 = vmatprep.subr.bf16.mxu0 0
    %357 = vmatpush1.bf16.msra.mxu0 %v254
    %358 = vmatprep.subr.bf16.mxu0 0
    %359 = vmatpush2.bf16.msra.mxu0 %v269
    %360 = vmatprep.subr.bf16.mxu0 0
    %361 = vmatpush2.bf16.msra.mxu0 %v268
    %362 = vmatprep.subr.bf16.mxu0 0
    %363 = vmatpush2.bf16.msra.mxu0 %v267
    %364 = vmatprep.subr.bf16.mxu0 0
    %365 = vmatpush2.bf16.msra.mxu0 %v266
    %366 = vmatprep.subr.bf16.mxu0 0
    %367 = vmatpush2.bf16.msra.mxu0 %v265
    %368 = vmatprep.subr.bf16.mxu0 0
    %369 = vmatpush2.bf16.msra.mxu0 %v264
    %370 = vmatprep.subr.bf16.mxu0 0
    %371 = vmatpush2.bf16.msra.mxu0 %v263
    %372 = vmatprep.subr.bf16.mxu0 0
    %373 = vmatpush2.bf16.msra.mxu0 %v262
    %374 = vmatprep.mubr.bf16.mxu0 %v105
    %375 = vmatmul.mubr.bf16.gmra.mxu0 %v104
    %v376 = vpop.f32.mrf.mxu0
    %v377 = vadd.f32 %v337, %v376
    %v378 = vpop.f32.mrf.mxu0
    %v379 = vpop.f32.mrf.mxu0
    %v380 = vpop.f32.mrf.mxu0
    %381 = vdwg.mxu0
    %vm382 = vcmask 261120
    %v383 = vsel %vm382, %v377, 0.0
    %v384 = vrot.slane %v383, 4
    %v385 = vadd.f32 %v383, %v384
    %v386 = vrot.slane %v385, 2
    %v387 = vadd.f32 %v385, %v386
    %v388 = vrot.slane %v387, 1
    %v389 = vadd.f32 %v387, %v388
    %v390 = vrcp.pop 8.0
    %v391 = vmul.f32 %v389, %v390
    %v392 = vsub.f32 %v377, %v391
    %v393 = vmul.f32 %v392, %v392
    %v394 = vsel %vm382, %v393, 0.0
    %v395 = vrot.slane %v394, 4
    %v396 = vadd.f32 %v394, %v395
    %v397 = vrot.slane %v396, 2
    %v398 = vadd.f32 %v396, %v397
    %v399 = vrot.slane %v398, 1
    %v400 = vadd.f32 %v398, %v399
    %v401 = vmul.f32 %v400, %v390
    %v402 = vadd.f32 %v401, 0.01
    %v403 = vrsqrt.pop %v402
    %v404 = vmul.f32 %v91, %v403
    %v405 = vmul.f32 %v391, %v404
    %v407 = vrot.slane %v405, 7
    %v409 = vsub.f32 %v91, %v407
    %v410 = vlaneseq
    %v411 = vshrl.u32 %v410, 7
    %v412 = vsub.s32 1, %v411
    %v413 = vrot.slane %v404, %v412
    %v414 = vmul.f32 %v377, %v413
    %v415 = vlaneseq
    %v416 = vshrl.u32 %v415, 7
    %v417 = vsub.s32 2, %v416
    %v418 = vrot.slane %v409, %v417
    %v419 = vadd.f32 %v414, %v418
    %420 = vst.msk [vmem:[#allocation4] sm:$0xff] %vm382, %v419
    %v421 = vpack.c.bf16 %v419, %v419
    %v422 = vld [vmem:[%s3] sm:$0xff]
    %v423 = vld [vmem:[%s3 + $0x8] sm:$0xff]
    %v424 = vld [vmem:[%s3 + $0x10] sm:$0xff]
    %v425 = vld [vmem:[%s3 + $0x18] sm:$0xff]
    %v426 = vld [vmem:[%s3 + $0x20] sm:$0xff]
    %v427 = vld [vmem:[%s3 + $0x28] sm:$0xff]
    %v428 = vld [vmem:[%s3 + $0x30] sm:$0xff]
    %v429 = vld [vmem:[%s3 + $0x38] sm:$0xff]
    %v430 = vld [vmem:[%s4] sm:$0x77]
    %v431 = vld [vmem:[%s4 + $0x8] sm:$0x77]
    %v434 = vlaneseq
    %v435 = vshrl.u32 %v434, 7
    %v436 = vsub.s32 0, %v435
    %v437 = vrot.slane %v430, %v436
    %v438 = vlaneseq
    %v439 = vshrl.u32 %v438, 7
    %v440 = vsub.s32 4, %v439
    %v441 = vrot.slane %v430, %v440
    %v442 = vlaneseq
    %v443 = vshrl.u32 %v442, 7
    %v444 = vsub.s32 0, %v443
    %v445 = vrot.slane %v431, %v444
    %v446 = vlaneseq
    %v447 = vshrl.u32 %v446, 7
    %v448 = vsub.s32 4, %v447
    %v449 = vrot.slane %v431, %v448
    %v454 = vlaneseq
    %v455 = vshrl.u32 %v454, 7
    %v456 = vsub.s32 0, %v455
    %v457 = vrot.slane %v437, %v456
    %v458 = vlaneseq
    %v459 = vshrl.u32 %v458, 7
    %v460 = vsub.s32 0, %v459
    %v461 = vrot.slane %v441, %v460
    %v462 = vlaneseq
    %v463 = vshrl.u32 %v462, 7
    %v464 = vsub.s32 0, %v463
    %v465 = vrot.slane %v445, %v464
    %v466 = vlaneseq
    %v467 = vshrl.u32 %v466, 7
    %v468 = vsub.s32 0, %v467
    %v469 = vrot.slane %v449, %v468
    %v478 = vunpack.c.l.b16 %v422
    %v479 = vunpack.c.h.b16 %v422
    %v480 = vunpack.c.l.b16 %v423
    %v481 = vunpack.c.h.b16 %v423
    %v482 = vunpack.c.l.b16 %v424
    %v483 = vunpack.c.h.b16 %v424
    %v484 = vunpack.c.l.b16 %v425
    %v485 = vunpack.c.h.b16 %v425
    %v486 = vunpack.c.l.b16 %v426
    %v487 = vunpack.c.h.b16 %v426
    %v488 = vunpack.c.l.b16 %v427
    %v489 = vunpack.c.h.b16 %v427
    %v490 = vunpack.c.l.b16 %v428
    %v491 = vunpack.c.h.b16 %v428
    %v492 = vunpack.c.l.b16 %v429
    %v493 = vunpack.c.h.b16 %v429
    %v494 = vpack.c.b16 %v482, %v478
    %v495 = vpack.c.b16 %v483, %v479
    %v496 = vpack.c.b16 %v484, %v480
    %v497 = vpack.c.b16 %v485, %v481
    %v498 = vpack.c.b16 %v490, %v486
    %v499 = vpack.c.b16 %v491, %v487
    %v500 = vpack.c.b16 %v492, %v488
    %v501 = vpack.c.b16 %v493, %v489
    %v511 = vsel %vm382, %v421, 0
    %513 = vmatprep.subr.bf16.mxu0 0
    %514 = vmatpush1.bf16.msra.mxu0 0
    %515 = vmatprep.subr.bf16.mxu0 0
    %516 = vmatpush1.bf16.msra.mxu0 0
    %517 = vmatprep.subr.bf16.mxu0 0
    %518 = vmatpush1.bf16.msra.mxu0 0
    %519 = vmatprep.subr.bf16.mxu0 0
    %520 = vmatpush1.bf16.msra.mxu0 0
    %521 = vmatprep.subr.bf16.mxu0 0
    %522 = vmatpush1.bf16.msra.mxu0 0
    %523 = vmatprep.subr.bf16.mxu0 0
    %524 = vmatpush1.bf16.msra.mxu0 0
    %525 = vmatprep.subr.bf16.mxu0 %v499
    %526 = vmatpush1.bf16.msra.mxu0 %v498
    %527 = vmatprep.subr.bf16.mxu0 %v495
    %528 = vmatpush1.bf16.msra.mxu0 %v494
    %529 = vmatprep.subr.bf16.mxu0 0
    %530 = vmatpush2.bf16.msra.mxu0 0
    %531 = vmatprep.subr.bf16.mxu0 0
    %532 = vmatpush2.bf16.msra.mxu0 0
    %533 = vmatprep.subr.bf16.mxu0 0
    %534 = vmatpush2.bf16.msra.mxu0 0
    %535 = vmatprep.subr.bf16.mxu0 0
    %536 = vmatpush2.bf16.msra.mxu0 0
    %537 = vmatprep.subr.bf16.mxu0 0
    %538 = vmatpush2.bf16.msra.mxu0 0
    %539 = vmatprep.subr.bf16.mxu0 0
    %540 = vmatpush2.bf16.msra.mxu0 0
    %541 = vmatprep.subr.bf16.mxu0 0
    %542 = vmatpush2.bf16.msra.mxu0 0
    %543 = vmatprep.subr.bf16.mxu0 0
    %544 = vmatpush2.bf16.msra.mxu0 0
    %545 = vmatprep.mubr.bf16.mxu0 0
    %546 = vmatmul.mubr.bf16.gmra.mxu0 %v511
    %v547 = vpop.f32.mrf.mxu0
    %v548 = vadd.f32 %v457, %v547
    %v549 = vpop.f32.mrf.mxu0
    %v550 = vadd.f32 %v461, %v549
    %v551 = vpop.f32.mrf.mxu0
    %v552 = vpop.f32.mrf.mxu0
    %553 = vdwg.mxu0
    %554 = vmatprep.subr.bf16.mxu0 0
    %555 = vmatpush1.bf16.msra.mxu0 0
    %556 = vmatprep.subr.bf16.mxu0 0
    %557 = vmatpush1.bf16.msra.mxu0 0
    %558 = vmatprep.subr.bf16.mxu0 0
    %559 = vmatpush1.bf16.msra.mxu0 0
    %560 = vmatprep.subr.bf16.mxu0 0
    %561 = vmatpush1.bf16.msra.mxu0 0
    %562 = vmatprep.subr.bf16.mxu0 0
    %563 = vmatpush1.bf16.msra.mxu0 0
    %564 = vmatprep.subr.bf16.mxu0 0
    %565 = vmatpush1.bf16.msra.mxu0 0
    %566 = vmatprep.subr.bf16.mxu0 %v501
    %567 = vmatpush1.bf16.msra.mxu0 %v500
    %568 = vmatprep.subr.bf16.mxu0 %v497
    %569 = vmatpush1.bf16.msra.mxu0 %v496
    %570 = vmatprep.subr.bf16.mxu0 0
    %571 = vmatpush2.bf16.msra.mxu0 0
    %572 = vmatprep.subr.bf16.mxu0 0
    %573 = vmatpush2.bf16.msra.mxu0 0
    %574 = vmatprep.subr.bf16.mxu0 0
    %575 = vmatpush2.bf16.msra.mxu0 0
    %576 = vmatprep.subr.bf16.mxu0 0
    %577 = vmatpush2.bf16.msra.mxu0 0
    %578 = vmatprep.subr.bf16.mxu0 0
    %579 = vmatpush2.bf16.msra.mxu0 0
    %580 = vmatprep.subr.bf16.mxu0 0
    %581 = vmatpush2.bf16.msra.mxu0 0
    %582 = vmatprep.subr.bf16.mxu0 0
    %583 = vmatpush2.bf16.msra.mxu0 0
    %584 = vmatprep.subr.bf16.mxu0 0
    %585 = vmatpush2.bf16.msra.mxu0 0
    %586 = vmatprep.mubr.bf16.mxu0 0
    %587 = vmatmul.mubr.bf16.gmra.mxu0 %v511
    %v588 = vpop.f32.mrf.mxu0
    %v589 = vadd.f32 %v465, %v588
    %v590 = vpop.f32.mrf.mxu0
    %v591 = vadd.f32 %v469, %v590
    %v592 = vpop.f32.mrf.mxu0
    %v593 = vpop.f32.mrf.mxu0
    %594 = vdwg.mxu0
    %v595 = vrot.slane %v548, 4
    %v596 = vadd.f32 %v548, %v595
    %v597 = vrot.slane %v596, 2
    %v598 = vadd.f32 %v596, %v597
    %v599 = vrot.slane %v598, 1
    %v600 = vadd.f32 %v598, %v599
    %v601 = vrot.slane %v550, 4
    %v602 = vadd.f32 %v550, %v601
    %v603 = vrot.slane %v602, 2
    %v604 = vadd.f32 %v602, %v603
    %v605 = vrot.slane %v604, 1
    %v606 = vadd.f32 %v604, %v605
    %v607 = vrot.slane %v589, 4
    %v608 = vadd.f32 %v589, %v607
    %v609 = vrot.slane %v608, 2
    %v610 = vadd.f32 %v608, %v609
    %v611 = vrot.slane %v610, 1
    %v612 = vadd.f32 %v610, %v611
    %v613 = vrot.slane %v591, 4
    %v614 = vadd.f32 %v591, %v613
    %v615 = vrot.slane %v614, 2
    %v616 = vadd.f32 %v614, %v615
    %v617 = vrot.slane %v616, 1
    %v618 = vadd.f32 %v616, %v617
    %v619 = vmul.f32 %v600, %v390
    %v620 = vmul.f32 %v606, %v390
    %v621 = vmul.f32 %v612, %v390
    %v622 = vmul.f32 %v618, %v390
    %v623 = vsub.f32 %v548, %v619
    %v624 = vsub.f32 %v550, %v620
    %v625 = vsub.f32 %v589, %v621
    %v626 = vsub.f32 %v591, %v622
    %v627 = vmul.f32 %v623, %v623
    %v628 = vmul.f32 %v624, %v624
    %v629 = vmul.f32 %v625, %v625
    %v630 = vmul.f32 %v626, %v626
    %v631 = vrot.slane %v627, 4
    %v632 = vadd.f32 %v627, %v631
    %v633 = vrot.slane %v632, 2
    %v634 = vadd.f32 %v632, %v633
    %v635 = vrot.slane %v634, 1
    %v636 = vadd.f32 %v634, %v635
    %v637 = vrot.slane %v628, 4
    %v638 = vadd.f32 %v628, %v637
    %v639 = vrot.slane %v638, 2
    %v640 = vadd.f32 %v638, %v639
    %v641 = vrot.slane %v640, 1
    %v642 = vadd.f32 %v640, %v641
    %v643 = vrot.slane %v629, 4
    %v644 = vadd.f32 %v629, %v643
    %v645 = vrot.slane %v644, 2
    %v646 = vadd.f32 %v644, %v645
    %v647 = vrot.slane %v646, 1
    %v648 = vadd.f32 %v646, %v647
    %v649 = vrot.slane %v630, 4
    %v650 = vadd.f32 %v630, %v649
    %v651 = vrot.slane %v650, 2
    %v652 = vadd.f32 %v650, %v651
    %v653 = vrot.slane %v652, 1
    %v654 = vadd.f32 %v652, %v653
    %v655 = vmul.f32 %v636, %v390
    %v656 = vmul.f32 %v642, %v390
    %v657 = vmul.f32 %v648, %v390
    %v658 = vmul.f32 %v654, %v390
    %v659 = vadd.f32 %v655, 0.01
    %v660 = vadd.f32 %v656, 0.01
    %v661 = vadd.f32 %v657, 0.01
    %v662 = vadd.f32 %v658, 0.01
    %v663 = vrsqrt.pop %v659
    %v664 = vrsqrt.pop %v660
    %v665 = vrsqrt.pop %v661
    %v666 = vrsqrt.pop %v662
    %v671 = vcombine.low %v663, %v664
    %v672 = vcombine.low %v665, %v666
    %v673 = vrot.slane %v671, 7
    %v674 = vrot.slane %v672, 7
    %v677 = vmul.f32 %v430, %v673
    %v678 = vmul.f32 %v431, %v674
    %v681 = vlaneseq
    %v682 = vshrl.u32 %v681, 7
    %v683 = vsub.s32 1, %v682
    %v684 = vrot.slane %v677, %v683
    %v685 = vlaneseq
    %v686 = vshrl.u32 %v685, 7
    %v687 = vsub.s32 5, %v686
    %v688 = vrot.slane %v677, %v687
    %v689 = vlaneseq
    %v690 = vshrl.u32 %v689, 7
    %v691 = vsub.s32 1, %v690
    %v692 = vrot.slane %v678, %v691
    %v693 = vlaneseq
    %v694 = vshrl.u32 %v693, 7
    %v695 = vsub.s32 5, %v694
    %v696 = vrot.slane %v678, %v695
    %v701 = vmul.f32 %v619, %v684
    %v702 = vmul.f32 %v620, %v688
    %v703 = vmul.f32 %v621, %v692
    %v704 = vmul.f32 %v622, %v696
    %v709 = vcombine.low %v701, %v702
    %v710 = vcombine.low %v703, %v704
    %v711 = vrot.slane %v709, 6
    %v712 = vrot.slane %v710, 6
    %v715 = vsub.f32 %v430, %v711
    %v716 = vsub.f32 %v431, %v712
    %v717 = vlaneseq
    %v718 = vshrl.u32 %v717, 7
    %v719 = vsub.s32 1, %v718
    %v720 = vrot.slane %v684, %v719
    %v721 = vlaneseq
    %v722 = vshrl.u32 %v721, 7
    %v723 = vsub.s32 1, %v722
    %v724 = vrot.slane %v688, %v723
    %v725 = vlaneseq
    %v726 = vshrl.u32 %v725, 7
    %v727 = vsub.s32 1, %v726
    %v728 = vrot.slane %v692, %v727
    %v729 = vlaneseq
    %v730 = vshrl.u32 %v729, 7
    %v731 = vsub.s32 1, %v730
    %v732 = vrot.slane %v696, %v731
    %v733 = vmul.f32 %v548, %v720
    %v734 = vmul.f32 %v550, %v724
    %v735 = vmul.f32 %v589, %v728
    %v736 = vmul.f32 %v591, %v732
    %v739 = vlaneseq
    %v740 = vshrl.u32 %v739, 7
    %v741 = vsub.s32 2, %v740
    %v742 = vrot.slane %v715, %v741
    %v743 = vlaneseq
    %v744 = vshrl.u32 %v743, 7
    %v745 = vsub.s32 6, %v744
    %v746 = vrot.slane %v715, %v745
    %v747 = vlaneseq
    %v748 = vshrl.u32 %v747, 7
    %v749 = vsub.s32 2, %v748
    %v750 = vrot.slane %v716, %v749
    %v751 = vlaneseq
    %v752 = vshrl.u32 %v751, 7
    %v753 = vsub.s32 6, %v752
    %v754 = vrot.slane %v716, %v753
    %v759 = vlaneseq
    %v760 = vshrl.u32 %v759, 7
    %v761 = vsub.s32 2, %v760
    %v762 = vrot.slane %v742, %v761
    %v763 = vlaneseq
    %v764 = vshrl.u32 %v763, 7
    %v765 = vsub.s32 2, %v764
    %v766 = vrot.slane %v746, %v765
    %v767 = vlaneseq
    %v768 = vshrl.u32 %v767, 7
    %v769 = vsub.s32 2, %v768
    %v770 = vrot.slane %v750, %v769
    %v771 = vlaneseq
    %v772 = vshrl.u32 %v771, 7
    %v773 = vsub.s32 2, %v772
    %v774 = vrot.slane %v754, %v773
    %v775 = vadd.f32 %v733, %v762
    %v776 = vadd.f32 %v734, %v766
    %v777 = vadd.f32 %v735, %v770
    %v778 = vadd.f32 %v736, %v774
    %v779 = vxor.u32 %v775, 2147483648
    %v780 = vxor.u32 %v776, 2147483648
    %v781 = vxor.u32 %v777, 2147483648
    %v782 = vxor.u32 %v778, 2147483648
    %v783 = vmul.f32 %v779, 1.442695
    %v784 = vpow.pop %v783
    %v785 = vmul.f32 %v780, 1.442695
    %v786 = vpow.pop %v785
    %v787 = vmul.f32 %v781, 1.442695
    %v788 = vpow.pop %v787
    %v789 = vmul.f32 %v782, 1.442695
    %v790 = vpow.pop %v789
    %v791 = vadd.f32 %v784, 1.0
    %v792 = vadd.f32 %v786, 1.0
    %v793 = vadd.f32 %v788, 1.0
    %v794 = vadd.f32 %v790, 1.0
    %v795 = vrcp.pop %v791
    %v796 = vmul.f32 1.0, %v795
    %v797 = vrcp.pop %v792
    %v798 = vmul.f32 1.0, %v797
    %v799 = vrcp.pop %v793
    %v800 = vmul.f32 1.0, %v799
    %v801 = vrcp.pop %v794
    %v802 = vmul.f32 1.0, %v801
    %803 = vst [vmem:[#allocation2] sm:$0xff] %v796
    %804 = vst [vmem:[#allocation2 + $0x8] sm:$0xff] %v798
    %805 = vst [vmem:[#allocation2 + $0x10] sm:$0xff] %v800
    %806 = vst [vmem:[#allocation2 + $0x18] sm:$0xff] %v802
    // Predicated region
    $region22: #{ae_binarize_forward.1} parent=1 // pred_check
      _
    $region23: #{ae_binarize_forward.1} parent=1 // pred_check_branch
      %808 = sbr.rel (0) target = $region25
    $region24: #{ae_binarize_forward.1} parent=1 // pred_region
      %s810 = ssub.s32 512, 512
      %811 = vsyncadd [#allocation3], %s810
      %s813 = sshll.u32 [#allocation2], 4
      %s814 = int_to_ptr.vmem [resolvable:$true] %s813
      %816 = dma.vmem_to_hbm [thread:$0]  %s814, 512, %s5, [#allocation3]
    $region25: #{ae_binarize_forward.1} parent=1 // pred_fallthru
      _
    // Predicated region
    $region26: #{ae_binarize_forward.1} parent=1 // pred_check
      _
    $region27: #{ae_binarize_forward.1} parent=1 // pred_check_branch
      %818 = sbr.rel (0) target = $region29
    $region28: #{ae_binarize_forward.1} parent=1 // pred_region
      %s820 = ssub.s32 128, 128
      %821 = vsyncadd [#allocation5], %s820
      %s823 = sshll.u32 [#allocation4], 4
      %s824 = int_to_ptr.vmem [resolvable:$true] %s823
      %826 = dma.vmem_to_hbm [thread:$0]  %s824, 128, %s6, [#allocation5]
    $region29: #{ae_binarize_forward.1} parent=1 // pred_fallthru
      _
    // Predicated region
    $region30: #{ae_binarize_forward.1} parent=1 // pred_check
      _
    $region31: #{ae_binarize_forward.1} parent=1 // pred_check_branch
      %828 = sbr.rel (0) target = $region33
    $region32: #{ae_binarize_forward.1} parent=1 // pred_region
      %829 = dma.done [#allocation3], 512
    $region33: #{ae_binarize_forward.1} parent=1 // pred_fallthru
      _
    // Predicated region
    $region34: #{ae_binarize_forward.1} parent=1 // pred_check
      _
    $region35: #{ae_binarize_forward.1} parent=1 // pred_check_branch
      %831 = sbr.rel (0) target = $region37
    $region36: #{ae_binarize_forward.1} parent=1 // pred_region
      %832 = dma.done [#allocation5], 128
    $region37: #{ae_binarize_forward.1} parent=1 // pred_fallthru
      _
    %833 = vsyncpa [#allocation3], 1
    %834 = vsyncpa [#allocation5], 1

</llo_original>
